<compile_context>
chip_gen: v7x
topology: tpu7x:2x2x1
jax: 0.10.0
libtpu: 0.0.40
codegen_flags: <defaults>
</compile_context>

<pallas_src>
import math
import functools

import jax
import jax.numpy as jnp
from jax import lax
from jax.experimental import pallas as pl
from jax.experimental.pallas import tpu as pltpu


# ---------------------------------------------------------------------------
# tiling helpers
# ---------------------------------------------------------------------------
def _sublane_granule(dtype):
    """Native sublane granule for the second-to-last tile dim: f32->8, bf16->16, int8/fp8->32."""
    return max(8, 32 // jnp.dtype(dtype).itemsize)


def _choose_tile(dim, pref, granule):
    """Largest tile <= pref that divides dim and sits on a native (granule, 128) boundary."""
    pref = min(pref, dim)
    if dim % pref == 0 and (pref % granule == 0 or pref == dim):
        return pref
    t = (pref // granule) * granule
    while t >= granule:
        if dim % t == 0:
            return t
        t -= granule
    return dim  # single full-dim block (full dims are always legal)


# ---------------------------------------------------------------------------
# Tiled projection matmul: bf16 operands, f32 MXU accumulation
# ---------------------------------------------------------------------------
def _matmul_kernel(x_ref, w_ref, o_ref, acc_ref):
    @pl.when(pl.program_id(2) == 0)
    def _init():
        acc_ref[...] = jnp.zeros_like(acc_ref)

    acc_ref[...] += jnp.dot(
        x_ref[...], w_ref[...], preferred_element_type=jnp.float32
    )

    @pl.when(pl.program_id(2) == pl.num_programs(2) - 1)
    def _store():
        o_ref[...] = acc_ref[...].astype(o_ref.dtype)


def pallas_matmul(x, w, *, tm=512, tn=512, tk=1024, out_dtype=None):
    """x: (M, K), w: (K, N) -> (M, N). Tiled, double-buffered, f32 accumulation."""
    M, K = x.shape
    K2, N = w.shape
    assert K == K2
    out_dtype = x.dtype if out_dtype is None else out_dtype
    row_gran = max(_sublane_granule(x.dtype), _sublane_granule(out_dtype))
    tm = _choose_tile(M, tm, row_gran)
    tn = _choose_tile(N, tn, 128)
    tk = _choose_tile(K, tk, 128)
    grid = (M // tm, N // tn, K // tk)
    return pl.pallas_call(
        _matmul_kernel,
        out_shape=jax.ShapeDtypeStruct((M, N), out_dtype),
        grid_spec=pltpu.PrefetchScalarGridSpec(
            num_scalar_prefetch=0,
            grid=grid,
            in_specs=[
                pl.BlockSpec((tm, tk), lambda i, j, k: (i, k)),
                pl.BlockSpec((tk, tn), lambda i, j, k: (k, j)),
            ],
            out_specs=pl.BlockSpec((tm, tn), lambda i, j, k: (i, j)),
            scratch_shapes=[pltpu.VMEM((tm, tn), jnp.float32)],
        ),
        compiler_params=pltpu.CompilerParams(
            dimension_semantics=("parallel", "parallel", "arbitrary"),
            vmem_limit_bytes=64 * 1024 * 1024,
        ),
    )(x, w)


# ---------------------------------------------------------------------------
# Flash attention: causal, GQA grouped, triangular grid via scalar prefetch
# ---------------------------------------------------------------------------
def _flash_attn_kernel(qi_tab_ref, ki_tab_ref, q_ref, k_ref, v_ref, o_ref,
                       m_sc, l_sc, acc_sc, *, scale):
    """One (q-tile, kv-tile) step for a whole GQA group.
    Blocks: q/o (1, G, T, D), k/v (1, 1, T, D); online-softmax scratch in f32."""
    t = pl.program_id(2)
    qi = qi_tab_ref[t]
    ki = ki_tab_ref[t]

    @pl.when(ki == 0)
    def _init():
        m_sc[...] = jnp.full_like(m_sc, -jnp.inf)
        l_sc[...] = jnp.zeros_like(l_sc)
        acc_sc[...] = jnp.zeros_like(acc_sc)

    def _update(masked):
        q = q_ref[0] * scale                      # (G, T, D) bf16; scale folded into q
        k = k_ref[0, 0]                           # (Tk, D)
        v = v_ref[0, 0]
        g = q.shape[0]
        kb = jnp.broadcast_to(k[None], (g,) + k.shape)
        vb = jnp.broadcast_to(v[None], (g,) + v.shape)
        s = jnp.einsum("gqd,gkd->gqk", q, kb, preferred_element_type=jnp.float32)
        if masked:
            row = lax.broadcasted_iota(jnp.int32, s.shape, 1)
            col = lax.broadcasted_iota(jnp.int32, s.shape, 2)
            s = jnp.where(col <= row, s, -jnp.inf)
        m_prev = m_sc[...]
        m_new = jnp.maximum(m_prev, jnp.max(s, axis=-1, keepdims=True))
        alpha = jnp.exp(m_prev - m_new)
        p = jnp.exp(s - m_new)                    # softmax math stays in f32
        l_sc[...] = alpha * l_sc[...] + jnp.sum(p, axis=-1, keepdims=True)
        acc_sc[...] = alpha * acc_sc[...] + jnp.einsum(
            "gqk,gkd->gqd", p.astype(v.dtype), vb,
            preferred_element_type=jnp.float32)
        m_sc[...] = m_new

    # Strictly-lower tiles of the causal triangle: no mask needed.
    @pl.when(ki < qi)
    def _interior():
        _update(masked=False)

    # Diagonal tile: causal mask; it is also the last kv tile of this q tile,
    # so normalize and write the output block here.
    @pl.when(ki == qi)
    def _diag_and_finalize():
        _update(masked=True)
        inv_l = pl.reciprocal(l_sc[...], approx=False)
        o_ref[0] = (acc_sc[...] * inv_l).astype(o_ref.dtype)


def pallas_flash_attention(q, k, v, *, groups, block_q=256):
    """
    q: (B, NH, S, D); k, v: (B, NKV, S, D) with NH == NKV * groups (un-repeated GQA).
    Returns causal attention output (B, NH, S, D).

    Grid is (B, NKV, triangular-steps): each instance handles all `groups` query
    heads of one KV head (K/V streamed once per group), and the (qi, ki) pairs are
    enumerated with scalar-prefetched tables so masked causal tiles cost neither a
    grid step nor a K/V DMA.
    """
    B, NH, S, D = q.shape
    _, NKV, _, _ = k.shape
    assert NH == NKV * groups

    T = _choose_tile(S, block_q, _sublane_granule(q.dtype))
    n_t = S // T
    qi_idx, ki_idx = [], []
    for qi in range(n_t):
        for ki in range(qi + 1):
            qi_idx.append(qi)
            ki_idx.append(ki)
    qi_tab = jnp.asarray(qi_idx, dtype=jnp.int32)
    ki_tab = jnp.asarray(ki_idx, dtype=jnp.int32)
    n_steps = len(qi_idx)

    scale = 1.0 / math.sqrt(D)
    kernel = functools.partial(_flash_attn_kernel, scale=scale)

    q_spec = pl.BlockSpec((1, groups, T, D), lambda b, h, t, qt, kt: (b, h, qt[t], 0))
    kv_spec = pl.BlockSpec((1, 1, T, D), lambda b, h, t, qt, kt: (b, h, kt[t], 0))
    o_spec = pl.BlockSpec((1, groups, T, D), lambda b, h, t, qt, kt: (b, h, qt[t], 0))

    return pl.pallas_call(
        kernel,
        out_shape=jax.ShapeDtypeStruct((B, NH, S, D), q.dtype),
        grid_spec=pltpu.PrefetchScalarGridSpec(
            num_scalar_prefetch=2,
            grid=(B, NKV, n_steps),
            in_specs=[q_spec, kv_spec, kv_spec],
            out_specs=o_spec,
            scratch_shapes=[
                pltpu.VMEM((groups, T, 1), jnp.float32),   # running max m
                pltpu.VMEM((groups, T, 1), jnp.float32),   # running sum l
                pltpu.VMEM((groups, T, D), jnp.float32),   # f32 output accumulator
            ],
        ),
        compiler_params=pltpu.CompilerParams(
            dimension_semantics=("parallel", "parallel", "arbitrary"),
            vmem_limit_bytes=64 * 1024 * 1024,
        ),
    )(qi_tab, ki_tab, q, k, v)


# ---------------------------------------------------------------------------
# FlashAttention module (forward pass)
# ---------------------------------------------------------------------------
class FlashAttentionPallas:
    def __init__(self, hidden_size, num_attention_heads, num_key_value_heads=None,
                 key=None, attn_block_q=256):
        if num_key_value_heads is None:
            num_key_value_heads = num_attention_heads
        if hidden_size % num_attention_heads != 0:
            raise ValueError("hidden_size must be divisible by num_attention_heads")
        if hidden_size % num_key_value_heads != 0:
            raise ValueError("hidden_size must be divisible by num_key_value_heads")
        self.hidden_size = hidden_size
        self.num_attention_heads = num_attention_heads
        self.num_key_value_heads = num_key_value_heads
        self.head_dim = hidden_size // num_attention_heads
        self.num_key_value_groups = num_attention_heads // num_key_value_heads
        self.attn_block_q = attn_block_q

        kv_out = self.num_key_value_heads * self.head_dim
        key = jax.random.PRNGKey(0) if key is None else key
        k_q, k_k, k_v, k_o = jax.random.split(key, 4)
        bound = 1.0 / math.sqrt(hidden_size)

        # Weights stored PRE-TRANSPOSED as (in, out) and in bf16: MXU-native dtype,
        # half the weight DMA bytes, f32 accumulation inside the matmul kernel.
        def init(kk, in_f, out_f):
            w = jax.random.uniform(kk, (in_f, out_f), jnp.float32,
                                   minval=-bound, maxval=bound)
            return w.astype(jnp.bfloat16)

        self.w_q = init(k_q, hidden_size, hidden_size)
        self.w_k = init(k_k, hidden_size, kv_out)
        self.w_v = init(k_v, hidden_size, kv_out)
        self.w_o = init(k_o, hidden_size, hidden_size)

    def _linear(self, x, w, out_dtype):
        B, S, In = x.shape
        out = pallas_matmul(x.reshape(B * S, In).astype(jnp.bfloat16), w,
                            out_dtype=out_dtype)
        return out.reshape(B, S, w.shape[1])

    def __call__(self, hidden_states, attention_mask=None, past_key_value=None):
        # TODO(synk): padding attention_mask and past_key_value (KV-cache concat)
        # paths are not implemented; this covers the causal self-attention path.
        assert attention_mask is None and past_key_value is None
        B, S, _ = hidden_states.shape
        H, NH, NKV, D = (self.hidden_size, self.num_attention_heads,
                         self.num_key_value_heads, self.head_dim)
        G = self.num_key_value_groups

        q = self._linear(hidden_states, self.w_q, jnp.bfloat16).reshape(B, S, NH, D)
        k = self._linear(hidden_states, self.w_k, jnp.bfloat16).reshape(B, S, NKV, D)
        v = self._linear(hidden_states, self.w_v, jnp.bfloat16).reshape(B, S, NKV, D)

        # present_key_value matches the PyTorch module's GQA-repeated (B, S, NH, D)
        # layout; this repeat exists only for cache-layout compatibility — the
        # attention kernel itself streams the un-repeated (B, NKV, S, D) K/V.
        if G > 1:
            pk = jnp.repeat(k, G, axis=2)
            pv = jnp.repeat(v, G, axis=2)
        else:
            pk, pv = k, v
        present_key_value = (pk, pv)

        # (B, heads, S, D) layout for the attention kernel (cheap bf16 transposes).
        q_t = jnp.transpose(q, (0, 2, 1, 3))
        k_t = jnp.transpose(k, (0, 2, 1, 3))
        v_t = jnp.transpose(v, (0, 2, 1, 3))

        attn = pallas_flash_attention(q_t, k_t, v_t, groups=G,
                                      block_q=self.attn_block_q)  # (B, NH, S, D)
        attn = jnp.transpose(attn, (0, 2, 1, 3)).reshape(B, S, H)

        output = self._linear(attn, self.w_o, jnp.float32)
        return output, present_key_value


# ---------------------------------------------------------------------------
# Pure-JAX reference (mirrors the kernel's bf16/f32 casting for a tight check)
# ---------------------------------------------------------------------------
def reference_forward(mod, x):
    B, S, _ = x.shape
    NH, NKV, D = mod.num_attention_heads, mod.num_key_value_heads, mod.head_dim
    G = mod.num_key_value_groups
    scale = 1.0 / math.sqrt(D)
    xb = x.astype(jnp.bfloat16)

    def lin(a, w):
        return jnp.dot(a, w, preferred_element_type=jnp.float32)

    q = lin(xb, mod.w_q).astype(jnp.bfloat16).reshape(B, S, NH, D)
    k = lin(xb, mod.w_k).astype(jnp.bfloat16).reshape(B, S, NKV, D)
    v = lin(xb, mod.w_v).astype(jnp.bfloat16).reshape(B, S, NKV, D)
    if G > 1:
        k = jnp.repeat(k, G, axis=2)
        v = jnp.repeat(v, G, axis=2)
    qt = jnp.transpose(q, (0, 2, 1, 3))
    kt = jnp.transpose(k, (0, 2, 1, 3)).astype(jnp.float32)
    vt = jnp.transpose(v, (0, 2, 1, 3)).astype(jnp.float32)
    qs = (qt * scale).astype(jnp.float32)          # mirrors the in-kernel bf16 q*scale
    s = jnp.einsum("bhqd,bhkd->bhqk", qs, kt)
    mask = jnp.tril(jnp.ones((S, S), dtype=bool))
    s = jnp.where(mask[None, None], s, -jnp.inf)
    p = jax.nn.softmax(s, axis=-1)
    o = jnp.einsum("bhqk,bhkd->bhqd",
                   p.astype(jnp.bfloat16).astype(jnp.float32), vt)
    attn = jnp.transpose(o, (0, 2, 1, 3)).reshape(B, S, NH * D).astype(jnp.bfloat16)
    return lin(attn, mod.w_o)


if __name__ == "__main__":
    B, S, H = 2, 64, 64
    NH, NKV = 4, 2          # GQA: 4 query heads sharing 2 KV heads, head_dim = 16

    key = jax.random.PRNGKey(0)
    k_x, k_w = jax.random.split(key)
    x = jax.random.normal(k_x, (B, S, H), jnp.float32)

    # attn_block_q=16 -> 4 q/kv tiles, so the triangular grid, unmasked interior
    # tiles and masked diagonal tiles are all exercised.
    mod = FlashAttentionPallas(H, NH, NKV, key=k_w, attn_block_q=16)
    out, (pk, pv) = mod(x)
    out = jax.block_until_ready(out)

    ref = reference_forward(mod, x)
    D = H // NH
    assert out.shape == (B, S, H)
    assert pk.shape == (B, S, NH, D) and pv.shape == (B, S, NH, D)
    assert bool(jnp.all(jnp.isfinite(out))), "non-finite output"
    assert jnp.allclose(out, ref, atol=2e-2, rtol=2e-2), "mismatch vs reference"
    print("KERNEL_OK")
</pallas_src>

<mosaic_0001>
module attributes {stable_mosaic.version = 11 : i64} {
  func.func @_matmul_kernel(%arg0: i32, %arg1: i32, %arg2: i32, %arg3: memref<128x64xbf16, #tpu.memory_space<vmem>>, %arg4: memref<64x64xbf16, #tpu.memory_space<vmem>>, %arg5: memref<128x64xbf16, #tpu.memory_space<vmem>>, %arg6: memref<128x64xf32, #tpu.memory_space<vmem>>) attributes {dimension_semantics = [#tpu.dimension_semantics<parallel>, #tpu.dimension_semantics<parallel>, #tpu.dimension_semantics<arbitrary>], iteration_bounds = array<i64: 1, 1, 1>, scalar_prefetch = 0 : i64, scratch_operands = 1 : i64, tpu.core_type = #tpu.core_type<tc>, window_params = [{transform_indices = @transform_0, window_bounds = array<i64: 128, 64>}, {transform_indices = @transform_1, window_bounds = array<i64: 64, 64>}, {transform_indices = @transform_2, window_bounds = array<i64: 128, 64>}]} {
    %c0_i32 = arith.constant 0 : i32
    %0 = arith.cmpi eq, %arg2, %c0_i32 : i32
    %1 = arith.extui %0 : i1 to i32
    %c0_i32_0 = arith.constant 0 : i32
    %2 = arith.cmpi ne, %1, %c0_i32_0 : i32
    scf.if %2 {
      %cst_10 = arith.constant 0.000000e+00 : f32
      %12 = vector.broadcast %cst_10 : f32 to vector<128x64xf32>
      %c0_11 = arith.constant 0 : index
      %c0_12 = arith.constant 0 : index
      %13 = vector.load %arg6[%c0_11, %c0_12] : memref<128x64xf32, #tpu.memory_space<vmem>>, vector<128x64xf32>
      tpu.vector_store %arg6[%c0_11, %c0_12], %12 {strides = array<i32>} : memref<128x64xf32, #tpu.memory_space<vmem>>, vector<128x64xf32>,
    } else {
    }
    %c0 = arith.constant 0 : index
    %c0_1 = arith.constant 0 : index
    %3 = vector.load %arg6[%c0, %c0_1] : memref<128x64xf32, #tpu.memory_space<vmem>>, vector<128x64xf32>
    %c0_2 = arith.constant 0 : index
    %c0_3 = arith.constant 0 : index
    %4 = vector.load %arg3[%c0_2, %c0_3] : memref<128x64xbf16, #tpu.memory_space<vmem>>, vector<128x64xbf16>
    %c0_4 = arith.constant 0 : index
    %c0_5 = arith.constant 0 : index
    %5 = vector.load %arg4[%c0_4, %c0_5] : memref<64x64xbf16, #tpu.memory_space<vmem>>, vector<64x64xbf16>
    %cst = arith.constant dense<0.000000e+00> : vector<128x64xf32>
    %6 = tpu.matmul %4, %5, %cst {dimension_numbers = #tpu.dot_dimension_numbers<[1], [0], [0], [1], [0, 0, 1, 1], [], []>} : vector<128x64xbf16>, vector<64x64xbf16>, vector<128x64xf32> -> vector<128x64xf32>
    %7 = arith.addf %3, %6 : vector<128x64xf32>
    %c0_6 = arith.constant 0 : index
    %c0_7 = arith.constant 0 : index
    %8 = vector.load %arg6[%c0_6, %c0_7] : memref<128x64xf32, #tpu.memory_space<vmem>>, vector<128x64xf32>
    tpu.vector_store %arg6[%c0_6, %c0_7], %7 {strides = array<i32>} : memref<128x64xf32, #tpu.memory_space<vmem>>, vector<128x64xf32>,
    %c0_i32_8 = arith.constant 0 : i32
    %9 = arith.cmpi eq, %arg2, %c0_i32_8 : i32
    %10 = arith.extui %9 : i1 to i32
    %c0_i32_9 = arith.constant 0 : i32
    %11 = arith.cmpi ne, %10, %c0_i32_9 : i32
    scf.if %11 {
      %c0_10 = arith.constant 0 : index
      %c0_11 = arith.constant 0 : index
      %12 = vector.load %arg6[%c0_10, %c0_11] : memref<128x64xf32, #tpu.memory_space<vmem>>, vector<128x64xf32>
      %13 = arith.truncf %12 : vector<128x64xf32> to vector<128x64xbf16>
      %c0_12 = arith.constant 0 : index
      %c0_13 = arith.constant 0 : index
      %14 = vector.load %arg5[%c0_12, %c0_13] : memref<128x64xbf16, #tpu.memory_space<vmem>>, vector<128x64xbf16>
      tpu.vector_store %arg5[%c0_12, %c0_13], %13 {strides = array<i32>} : memref<128x64xbf16, #tpu.memory_space<vmem>>, vector<128x64xbf16>,
    } else {
    }
    return
  }
  func.func @transform_0(%arg0: i32, %arg1: i32, %arg2: i32) -> (i32, i32) {
    %c0_i32 = arith.constant 0 : i32
    return %arg0, %arg2 : i32, i32
  }
  func.func @transform_1(%arg0: i32, %arg1: i32, %arg2: i32) -> (i32, i32) {
    %c0_i32 = arith.constant 0 : i32
    return %arg2, %arg1 : i32, i32
  }
  func.func @transform_2(%arg0: i32, %arg1: i32, %arg2: i32) -> (i32, i32) {
    %c0_i32 = arith.constant 0 : i32
    return %arg0, %arg1 : i32, i32
  }
}

</mosaic_0001>

<llo_original>
// kernel: tpu_custom_call.1
$region0: #{tpu_custom_call.1}
  #allocation0 [shape = 'u32[]', space=smem, size = 0x4, offset = 0x4, fixed_abs, tag = 'smem constant byte address 0x4 - core index']
  #allocation1 [shape = 'u32[144,128]{1,0:T(1,128)}', space=vmem, size = 0x12000, scoped, tag = 'internal scratch']
  #allocation2 [shape = 'f32[128,64]{1,0:T(8,128)}', space=vmem, size = 0x10000, scoped, tag = 'scratch operand']
  %s0 = inlined_call_operand.hbm [shape: bf16[128,64], index: 0, kind: input, shape index: {}]
  %s1 = inlined_call_operand.hbm [shape: bf16[64,64], index: 1, kind: input, shape index: {}]
  %s2 = inlined_call_operand.hbm [shape: bf16[128,64], index: 2, kind: output, shape index: {}]
  %s3 = sld [smem:[#allocation0]]
  $region34: #{tpu_custom_call.1} parent=0
    _
  %s5 = ssub.s32 1, %s3
  %s6 = scalar_select 0, %s5, %s3
  $region1: #{tpu_custom_call.1} parent=0
    #allocation3 [shape = 'u8[32768]{0}', space=vmem, size = 0x8000, scoped, tag = 'input window, operand 0, single buffered']
    #allocation4 [shape = 's32[1]{0}', space=sflag, size = 0x4, scoped, tag = 'scoped memory for tpu_custom_call.1']
    #allocation5 [shape = 's32[1]{0}', space=sflag, size = 0x4, scoped, tag = 'scoped memory for tpu_custom_call.1']
    #allocation6 [shape = 'u8[16384]{0}', space=vmem, size = 0x4000, scoped, tag = 'input window, operand 1, single buffered']
    #allocation7 [shape = 's32[1]{0}', space=sflag, size = 0x4, scoped, tag = 'scoped memory for tpu_custom_call.1']
    #allocation8 [shape = 'u8[32768]{0}', space=vmem, size = 0x8000, scoped, tag = 'output window, operand 0, single buffered']
    %7 = vsyncpa [#allocation4], 0
    %8 = vsyncpa [#allocation7], 0
    %9 = vsyncpa [#allocation5], 0
    // Predicated region
    $region2: #{tpu_custom_call.1} parent=1 // pred_check
      _
    $region3: #{tpu_custom_call.1} parent=1 // pred_check_branch
      %11 = sbr.rel (0) target = $region5
    $region4: #{tpu_custom_call.1} parent=1 // pred_region
      %s13 = ssub.s32 1024, 1024
      %14 = vsyncadd [#allocation4], %s13
      %s15 = sshll.u32 [#allocation3], 4
      %s16 = int_to_ptr.vmem [resolvable:$true] %s15
      %21 = dma.hbm_to_vmem [thread:$0]  %s0, 1024, %s16, [#allocation4], 64, 64, 4
    $region5: #{tpu_custom_call.1} parent=1 // pred_fallthru
      _
    // Predicated region
    $region6: #{tpu_custom_call.1} parent=1 // pred_check
      _
    $region7: #{tpu_custom_call.1} parent=1 // pred_check_branch
      %23 = sbr.rel (0) target = $region9
    $region8: #{tpu_custom_call.1} parent=1 // pred_region
      %s25 = ssub.s32 512, 512
      %26 = vsyncadd [#allocation7], %s25
      %s27 = sshll.u32 [#allocation6], 4
      %s28 = int_to_ptr.vmem [resolvable:$true] %s27
      %33 = dma.hbm_to_vmem [thread:$0]  %s1, 512, %s28, [#allocation7], 64, 64, 4
    $region9: #{tpu_custom_call.1} parent=1 // pred_fallthru
      _
    // Predicated region
    $region10: #{tpu_custom_call.1} parent=1 // pred_check
      _
    $region11: #{tpu_custom_call.1} parent=1 // pred_check_branch
      %35 = sbr.rel (0) target = $region13
    $region12: #{tpu_custom_call.1} parent=1 // pred_region
      %36 = dma.done [#allocation4], 1024
    $region13: #{tpu_custom_call.1} parent=1 // pred_fallthru
      _
    // Predicated region
    $region14: #{tpu_custom_call.1} parent=1 // pred_check
      _
    $region15: #{tpu_custom_call.1} parent=1 // pred_check_branch
      %38 = sbr.rel (0) target = $region17
    $region16: #{tpu_custom_call.1} parent=1 // pred_region
      %39 = dma.done [#allocation7], 512
    $region17: #{tpu_custom_call.1} parent=1 // pred_fallthru
      _
    %p41 = scmp.eq.s32.totalorder 0, 0
    // Predicated region
    $region18: #{tpu_custom_call.1} parent=1 // pred_check
      %p42 = pneg %p41
    $region19: #{tpu_custom_call.1} parent=1 // pred_check_branch
      %44 = sbr.rel (%p42) target = $region21
    $region20: #{tpu_custom_call.1} parent=1 // pred_region
      %vm45 = vcmask 523264
      %46 = vst.msk [vmem:[#allocation2] sm:$0xff] %vm45, 0.0
      %47 = vst.msk [vmem:[#allocation2 + $0x8] sm:$0xff] %vm45, 0.0
      %48 = vst.msk [vmem:[#allocation2 + $0x10] sm:$0xff] %vm45, 0.0
      %49 = vst.msk [vmem:[#allocation2 + $0x18] sm:$0xff] %vm45, 0.0
      %50 = vst.msk [vmem:[#allocation2 + $0x20] sm:$0xff] %vm45, 0.0
      %51 = vst.msk [vmem:[#allocation2 + $0x28] sm:$0xff] %vm45, 0.0
      %52 = vst.msk [vmem:[#allocation2 + $0x30] sm:$0xff] %vm45, 0.0
      %53 = vst.msk [vmem:[#allocation2 + $0x38] sm:$0xff] %vm45, 0.0
      %54 = vst.msk [vmem:[#allocation2 + $0x40] sm:$0xff] %vm45, 0.0
      %55 = vst.msk [vmem:[#allocation2 + $0x48] sm:$0xff] %vm45, 0.0
      %56 = vst.msk [vmem:[#allocation2 + $0x50] sm:$0xff] %vm45, 0.0
      %57 = vst.msk [vmem:[#allocation2 + $0x58] sm:$0xff] %vm45, 0.0
      %58 = vst.msk [vmem:[#allocation2 + $0x60] sm:$0xff] %vm45, 0.0
      %59 = vst.msk [vmem:[#allocation2 + $0x68] sm:$0xff] %vm45, 0.0
      %60 = vst.msk [vmem:[#allocation2 + $0x70] sm:$0xff] %vm45, 0.0
      %61 = vst.msk [vmem:[#allocation2 + $0x78] sm:$0xff] %vm45, 0.0
    $region21: #{tpu_custom_call.1} parent=1 // pred_fallthru
      _
    %v62 = vld [vmem:[#allocation2] sm:$0xff]
    %v63 = vld [vmem:[#allocation2 + $0x8] sm:$0xff]
    %v64 = vld [vmem:[#allocation2 + $0x10] sm:$0xff]
    %v65 = vld [vmem:[#allocation2 + $0x18] sm:$0xff]
    %v66 = vld [vmem:[#allocation2 + $0x20] sm:$0xff]
    %v67 = vld [vmem:[#allocation2 + $0x28] sm:$0xff]
    %v68 = vld [vmem:[#allocation2 + $0x30] sm:$0xff]
    %v69 = vld [vmem:[#allocation2 + $0x38] sm:$0xff]
    %v70 = vld [vmem:[#allocation2 + $0x40] sm:$0xff]
    %v71 = vld [vmem:[#allocation2 + $0x48] sm:$0xff]
    %v72 = vld [vmem:[#allocation2 + $0x50] sm:$0xff]
    %v73 = vld [vmem:[#allocation2 + $0x58] sm:$0xff]
    %v74 = vld [vmem:[#allocation2 + $0x60] sm:$0xff]
    %v75 = vld [vmem:[#allocation2 + $0x68] sm:$0xff]
    %v76 = vld [vmem:[#allocation2 + $0x70] sm:$0xff]
    %v77 = vld [vmem:[#allocation2 + $0x78] sm:$0xff]
    %v78 = vld [vmem:[#allocation3] sm:$0xf]
    %v79 = vld [vmem:[#allocation3 + $0x4] sm:$0xf]
    %v80 = vld [vmem:[#allocation3 + $0x8] sm:$0xf]
    %v81 = vld [vmem:[#allocation3 + $0xc] sm:$0xf]
    %v82 = vld [vmem:[#allocation3 + $0x10] sm:$0xf]
    %v83 = vld [vmem:[#allocation3 + $0x14] sm:$0xf]
    %v84 = vld [vmem:[#allocation3 + $0x18] sm:$0xf]
    %v85 = vld [vmem:[#allocation3 + $0x1c] sm:$0xf]
    %v86 = vld [vmem:[#allocation3 + $0x20] sm:$0xf]
    %v87 = vld [vmem:[#allocation3 + $0x24] sm:$0xf]
    %v88 = vld [vmem:[#allocation3 + $0x28] sm:$0xf]
    %v89 = vld [vmem:[#allocation3 + $0x2c] sm:$0xf]
    %v90 = vld [vmem:[#allocation3 + $0x30] sm:$0xf]
    %v91 = vld [vmem:[#allocation3 + $0x34] sm:$0xf]
    %v92 = vld [vmem:[#allocation3 + $0x38] sm:$0xf]
    %v93 = vld [vmem:[#allocation3 + $0x3c] sm:$0xf]
    %v94 = vld [vmem:[#allocation6] sm:$0xf]
    %v95 = vld [vmem:[#allocation6 + $0x4] sm:$0xf]
    %v96 = vld [vmem:[#allocation6 + $0x8] sm:$0xf]
    %v97 = vld [vmem:[#allocation6 + $0xc] sm:$0xf]
    %v98 = vld [vmem:[#allocation6 + $0x10] sm:$0xf]
    %v99 = vld [vmem:[#allocation6 + $0x14] sm:$0xf]
    %v100 = vld [vmem:[#allocation6 + $0x18] sm:$0xf]
    %v101 = vld [vmem:[#allocation6 + $0x1c] sm:$0xf]
    %v118 = vunpack.c.l.b16 %v78
    %v119 = vunpack.c.l.b16 %v79
    %v120 = vunpack.c.l.b16 %v80
    %v121 = vunpack.c.l.b16 %v81
    %v122 = vunpack.c.l.b16 %v82
    %v123 = vunpack.c.l.b16 %v83
    %v124 = vunpack.c.l.b16 %v84
    %v125 = vunpack.c.l.b16 %v85
    %v126 = vunpack.c.l.b16 %v86
    %v127 = vunpack.c.l.b16 %v87
    %v128 = vunpack.c.l.b16 %v88
    %v129 = vunpack.c.l.b16 %v89
    %v130 = vunpack.c.l.b16 %v90
    %v131 = vunpack.c.l.b16 %v91
    %v132 = vunpack.c.l.b16 %v92
    %v133 = vunpack.c.l.b16 %v93
    %v134 = vpack.c.b16 %v119, %v118
    %v135 = vpack.c.b16 %v121, %v120
    %v136 = vpack.c.b16 %v123, %v122
    %v137 = vpack.c.b16 %v125, %v124
    %v138 = vpack.c.b16 %v127, %v126
    %v139 = vpack.c.b16 %v129, %v128
    %v140 = vpack.c.b16 %v131, %v130
    %v141 = vpack.c.b16 %v133, %v132
    %v150 = vunpack.c.l.b16 %v94
    %v151 = vunpack.c.l.b16 %v95
    %v152 = vunpack.c.l.b16 %v96
    %v153 = vunpack.c.l.b16 %v97
    %v154 = vunpack.c.l.b16 %v98
    %v155 = vunpack.c.l.b16 %v99
    %v156 = vunpack.c.l.b16 %v100
    %v157 = vunpack.c.l.b16 %v101
    %v158 = vpack.c.b16 %v151, %v150
    %v159 = vpack.c.b16 %v153, %v152
    %v160 = vpack.c.b16 %v155, %v154
    %v161 = vpack.c.b16 %v157, %v156
    %vm166 = vcmask 523264
    %v168 = vsel %vm166, %v134, 0
    %v171 = vsel %vm166, %v135, 0
    %v174 = vsel %vm166, %v136, 0
    %v177 = vsel %vm166, %v137, 0
    %v180 = vsel %vm166, %v138, 0
    %v183 = vsel %vm166, %v139, 0
    %v186 = vsel %vm166, %v140, 0
    %v189 = vsel %vm166, %v141, 0
    %191 = vmatprep.subr.bf16.mxu0 0
    %192 = vmatpush1.bf16.msra.mxu0 %v158
    %193 = vmatprep.subr.bf16.mxu0 0
    %194 = vmatpush1.bf16.msra.mxu0 %v159
    %195 = vmatprep.subr.bf16.mxu0 0
    %196 = vmatpush1.bf16.msra.mxu0 %v160
    %197 = vmatprep.subr.bf16.mxu0 0
    %198 = vmatpush1.bf16.msra.mxu0 %v161
    %199 = vmatprep.subr.bf16.mxu0 0
    %200 = vmatpush1.bf16.msra.mxu0 0
    %201 = vmatprep.subr.bf16.mxu0 0
    %202 = vmatpush1.bf16.msra.mxu0 0
    %203 = vmatprep.subr.bf16.mxu0 0
    %204 = vmatpush1.bf16.msra.mxu0 0
    %205 = vmatprep.subr.bf16.mxu0 0
    %206 = vmatpush1.bf16.msra.mxu0 0
    %207 = vmatprep.subr.bf16.mxu0 0
    %208 = vmatpush1.bf16.msra.mxu0 0
    %209 = vmatprep.subr.bf16.mxu0 0
    %210 = vmatpush1.bf16.msra.mxu0 0
    %211 = vmatprep.subr.bf16.mxu0 0
    %212 = vmatpush1.bf16.msra.mxu0 0
    %213 = vmatprep.subr.bf16.mxu0 0
    %214 = vmatpush1.bf16.msra.mxu0 0
    %215 = vmatprep.subr.bf16.mxu0 0
    %216 = vmatpush1.bf16.msra.mxu0 0
    %217 = vmatprep.subr.bf16.mxu0 0
    %218 = vmatpush1.bf16.msra.mxu0 0
    %219 = vmatprep.subr.bf16.mxu0 0
    %220 = vmatpush1.bf16.msra.mxu0 0
    %221 = vmatprep.subr.bf16.mxu0 0
    %222 = vmatpush1.bf16.msra.mxu0 0
    %223 = vmatprep.mubr.bf16.mxu0 0
    %224 = vmatmul.mubr.bf16.gmra.mrb[0].mxu0 %v168
    %v225 = vpop.f32.mrb[0].mxu0
    %v226 = vadd.f32 0.0, %v225
    %v227 = vpop.f32.mrb[0].mxu0
    %v228 = vpop.f32.mrb[0].mxu0
    %v229 = vadd.f32 0.0, %v228
    %v230 = vpop.f32.mrb[0].mxu0
    %231 = vmatprep.mubr.bf16.mxu0 0
    %232 = vmatmul.mubr.bf16.gmra.mrb[0].mxu0 %v171
    %v233 = vpop.f32.mrb[0].mxu0
    %v234 = vadd.f32 0.0, %v233
    %v235 = vpop.f32.mrb[0].mxu0
    %v236 = vpop.f32.mrb[0].mxu0
    %v237 = vadd.f32 0.0, %v236
    %v238 = vpop.f32.mrb[0].mxu0
    %239 = vmatprep.mubr.bf16.mxu0 0
    %240 = vmatmul.mubr.bf16.gmra.mrb[0].mxu0 %v174
    %v241 = vpop.f32.mrb[0].mxu0
    %v242 = vadd.f32 0.0, %v241
    %v243 = vpop.f32.mrb[0].mxu0
    %v244 = vpop.f32.mrb[0].mxu0
    %v245 = vadd.f32 0.0, %v244
    %v246 = vpop.f32.mrb[0].mxu0
    %247 = vmatprep.mubr.bf16.mxu0 0
    %248 = vmatmul.mubr.bf16.gmra.mrb[0].mxu0 %v177
    %v249 = vpop.f32.mrb[0].mxu0
    %v250 = vadd.f32 0.0, %v249
    %v251 = vpop.f32.mrb[0].mxu0
    %v252 = vpop.f32.mrb[0].mxu0
    %v253 = vadd.f32 0.0, %v252
    %v254 = vpop.f32.mrb[0].mxu0
    %255 = vmatprep.mubr.bf16.mxu0 0
    %256 = vmatmul.mubr.bf16.gmra.mrb[0].mxu0 %v180
    %v257 = vpop.f32.mrb[0].mxu0
    %v258 = vadd.f32 0.0, %v257
    %v259 = vpop.f32.mrb[0].mxu0
    %v260 = vpop.f32.mrb[0].mxu0
    %v261 = vadd.f32 0.0, %v260
    %v262 = vpop.f32.mrb[0].mxu0
    %263 = vmatprep.mubr.bf16.mxu0 0
    %264 = vmatmul.mubr.bf16.gmra.mrb[0].mxu0 %v183
    %v265 = vpop.f32.mrb[0].mxu0
    %v266 = vadd.f32 0.0, %v265
    %v267 = vpop.f32.mrb[0].mxu0
    %v268 = vpop.f32.mrb[0].mxu0
    %v269 = vadd.f32 0.0, %v268
    %v270 = vpop.f32.mrb[0].mxu0
    %271 = vmatprep.mubr.bf16.mxu0 0
    %272 = vmatmul.mubr.bf16.gmra.mrb[0].mxu0 %v186
    %v273 = vpop.f32.mrb[0].mxu0
    %v274 = vadd.f32 0.0, %v273
    %v275 = vpop.f32.mrb[0].mxu0
    %v276 = vpop.f32.mrb[0].mxu0
    %v277 = vadd.f32 0.0, %v276
    %v278 = vpop.f32.mrb[0].mxu0
    %279 = vmatprep.mubr.bf16.mxu0 0
    %280 = vmatmul.mubr.bf16.gmra.mrb[0].mxu0 %v189
    %v281 = vpop.f32.mrb[0].mxu0
    %v282 = vadd.f32 0.0, %v281
    %v283 = vpop.f32.mrb[0].mxu0
    %v284 = vpop.f32.mrb[0].mxu0
    %v285 = vadd.f32 0.0, %v284
    %v286 = vpop.f32.mrb[0].mxu0
    %287 = vdwg.mxu0
    %v288 = vadd.f32 %v62, %v226
    %v289 = vadd.f32 %v63, %v229
    %v290 = vadd.f32 %v64, %v234
    %v291 = vadd.f32 %v65, %v237
    %v292 = vadd.f32 %v66, %v242
    %v293 = vadd.f32 %v67, %v245
    %v294 = vadd.f32 %v68, %v250
    %v295 = vadd.f32 %v69, %v253
    %v296 = vadd.f32 %v70, %v258
    %v297 = vadd.f32 %v71, %v261
    %v298 = vadd.f32 %v72, %v266
    %v299 = vadd.f32 %v73, %v269
    %v300 = vadd.f32 %v74, %v274
    %v301 = vadd.f32 %v75, %v277
    %v302 = vadd.f32 %v76, %v282
    %v303 = vadd.f32 %v77, %v285
    %304 = vst.msk [vmem:[#allocation2] sm:$0xff] %vm166, %v288
    %305 = vst.msk [vmem:[#allocation2 + $0x8] sm:$0xff] %vm166, %v289
    %306 = vst.msk [vmem:[#allocation2 + $0x10] sm:$0xff] %vm166, %v290
    %307 = vst.msk [vmem:[#allocation2 + $0x18] sm:$0xff] %vm166, %v291
    %308 = vst.msk [vmem:[#allocation2 + $0x20] sm:$0xff] %vm166, %v292
    %309 = vst.msk [vmem:[#allocation2 + $0x28] sm:$0xff] %vm166, %v293
    %310 = vst.msk [vmem:[#allocation2 + $0x30] sm:$0xff] %vm166, %v294
    %311 = vst.msk [vmem:[#allocation2 + $0x38] sm:$0xff] %vm166, %v295
    %312 = vst.msk [vmem:[#allocation2 + $0x40] sm:$0xff] %vm166, %v296
    %313 = vst.msk [vmem:[#allocation2 + $0x48] sm:$0xff] %vm166, %v297
    %314 = vst.msk [vmem:[#allocation2 + $0x50] sm:$0xff] %vm166, %v298
    %315 = vst.msk [vmem:[#allocation2 + $0x58] sm:$0xff] %vm166, %v299
    %316 = vst.msk [vmem:[#allocation2 + $0x60] sm:$0xff] %vm166, %v300
    %317 = vst.msk [vmem:[#allocation2 + $0x68] sm:$0xff] %vm166, %v301
    %318 = vst.msk [vmem:[#allocation2 + $0x70] sm:$0xff] %vm166, %v302
    %319 = vst.msk [vmem:[#allocation2 + $0x78] sm:$0xff] %vm166, %v303
    // Predicated region
    $region22: #{tpu_custom_call.1} parent=1 // pred_check
      %p320 = pneg %p41
    $region23: #{tpu_custom_call.1} parent=1 // pred_check_branch
      %322 = sbr.rel (%p320) target = $region25
    $region24: #{tpu_custom_call.1} parent=1 // pred_region
      %v323 = vld [vmem:[#allocation2] sm:$0xff]
      %v324 = vld [vmem:[#allocation2 + $0x8] sm:$0xff]
      %v325 = vld [vmem:[#allocation2 + $0x10] sm:$0xff]
      %v326 = vld [vmem:[#allocation2 + $0x18] sm:$0xff]
      %v327 = vld [vmem:[#allocation2 + $0x20] sm:$0xff]
      %v328 = vld [vmem:[#allocation2 + $0x28] sm:$0xff]
      %v329 = vld [vmem:[#allocation2 + $0x30] sm:$0xff]
      %v330 = vld [vmem:[#allocation2 + $0x38] sm:$0xff]
      %v331 = vld [vmem:[#allocation2 + $0x40] sm:$0xff]
      %v332 = vld [vmem:[#allocation2 + $0x48] sm:$0xff]
      %v333 = vld [vmem:[#allocation2 + $0x50] sm:$0xff]
      %v334 = vld [vmem:[#allocation2 + $0x58] sm:$0xff]
      %v335 = vld [vmem:[#allocation2 + $0x60] sm:$0xff]
      %v336 = vld [vmem:[#allocation2 + $0x68] sm:$0xff]
      %v337 = vld [vmem:[#allocation2 + $0x70] sm:$0xff]
      %v338 = vld [vmem:[#allocation2 + $0x78] sm:$0xff]
      %v339 = vpack.c.bf16 %v324, %v323
      %v340 = vpack.c.bf16 %v326, %v325
      %v341 = vpack.c.bf16 %v328, %v327
      %v342 = vpack.c.bf16 %v330, %v329
      %v343 = vpack.c.bf16 %v332, %v331
      %v344 = vpack.c.bf16 %v334, %v333
      %v345 = vpack.c.bf16 %v336, %v335
      %v346 = vpack.c.bf16 %v338, %v337
      %v355 = vunpack.c.l.b16 %v339
      %v356 = vunpack.c.h.b16 %v339
      %v357 = vunpack.c.l.b16 %v340
      %v358 = vunpack.c.h.b16 %v340
      %v359 = vunpack.c.l.b16 %v341
      %v360 = vunpack.c.h.b16 %v341
      %v361 = vunpack.c.l.b16 %v342
      %v362 = vunpack.c.h.b16 %v342
      %v363 = vunpack.c.l.b16 %v343
      %v364 = vunpack.c.h.b16 %v343
      %v365 = vunpack.c.l.b16 %v344
      %v366 = vunpack.c.h.b16 %v344
      %v367 = vunpack.c.l.b16 %v345
      %v368 = vunpack.c.h.b16 %v345
      %v369 = vunpack.c.l.b16 %v346
      %v370 = vunpack.c.h.b16 %v346
      %v371 = vpack.c.b16 %v355, %v355
      %v372 = vpack.c.b16 %v356, %v356
      %v373 = vpack.c.b16 %v357, %v357
      %v374 = vpack.c.b16 %v358, %v358
      %v375 = vpack.c.b16 %v359, %v359
      %v376 = vpack.c.b16 %v360, %v360
      %v377 = vpack.c.b16 %v361, %v361
      %v378 = vpack.c.b16 %v362, %v362
      %v379 = vpack.c.b16 %v363, %v363
      %v380 = vpack.c.b16 %v364, %v364
      %v381 = vpack.c.b16 %v365, %v365
      %v382 = vpack.c.b16 %v366, %v366
      %v383 = vpack.c.b16 %v367, %v367
      %v384 = vpack.c.b16 %v368, %v368
      %v385 = vpack.c.b16 %v369, %v369
      %v386 = vpack.c.b16 %v370, %v370
      %vm403 = vcmask 519168
      %404 = vst.msk [vmem:[#allocation8] sm:$0xf] %vm403, %v371
      %405 = vst.msk [vmem:[#allocation8 + $0x4] sm:$0xf] %vm403, %v372
      %406 = vst.msk [vmem:[#allocation8 + $0x8] sm:$0xf] %vm403, %v373
      %407 = vst.msk [vmem:[#allocation8 + $0xc] sm:$0xf] %vm403, %v374
      %408 = vst.msk [vmem:[#allocation8 + $0x10] sm:$0xf] %vm403, %v375
      %409 = vst.msk [vmem:[#allocation8 + $0x14] sm:$0xf] %vm403, %v376
      %410 = vst.msk [vmem:[#allocation8 + $0x18] sm:$0xf] %vm403, %v377
      %411 = vst.msk [vmem:[#allocation8 + $0x1c] sm:$0xf] %vm403, %v378
      %412 = vst.msk [vmem:[#allocation8 + $0x20] sm:$0xf] %vm403, %v379
      %413 = vst.msk [vmem:[#allocation8 + $0x24] sm:$0xf] %vm403, %v380
      %414 = vst.msk [vmem:[#allocation8 + $0x28] sm:$0xf] %vm403, %v381
      %415 = vst.msk [vmem:[#allocation8 + $0x2c] sm:$0xf] %vm403, %v382
      %416 = vst.msk [vmem:[#allocation8 + $0x30] sm:$0xf] %vm403, %v383
      %417 = vst.msk [vmem:[#allocation8 + $0x34] sm:$0xf] %vm403, %v384
      %418 = vst.msk [vmem:[#allocation8 + $0x38] sm:$0xf] %vm403, %v385
      %419 = vst.msk [vmem:[#allocation8 + $0x3c] sm:$0xf] %vm403, %v386
    $region25: #{tpu_custom_call.1} parent=1 // pred_fallthru
      _
    // Predicated region
    $region26: #{tpu_custom_call.1} parent=1 // pred_check
      _
    $region27: #{tpu_custom_call.1} parent=1 // pred_check_branch
      %421 = sbr.rel (0) target = $region29
    $region28: #{tpu_custom_call.1} parent=1 // pred_region
      %s423 = ssub.s32 1024, 1024
      %424 = vsyncadd [#allocation5], %s423
      %s425 = sshll.u32 [#allocation8], 4
      %s426 = int_to_ptr.vmem [resolvable:$true] %s425
      %431 = dma.vmem_to_hbm [thread:$0]  %s426, 1024, %s2, [#allocation5], 64, 64, 4
    $region29: #{tpu_custom_call.1} parent=1 // pred_fallthru
      _
    // Predicated region
    $region30: #{tpu_custom_call.1} parent=1 // pred_check
      _
    $region31: #{tpu_custom_call.1} parent=1 // pred_check_branch
      %433 = sbr.rel (0) target = $region33
    $region32: #{tpu_custom_call.1} parent=1 // pred_region
      %434 = dma.done [#allocation5], 1024
    $region33: #{tpu_custom_call.1} parent=1 // pred_fallthru
      _
    %435 = vsyncpa [#allocation4], 1
    %436 = vsyncpa [#allocation7], 1
    %437 = vsyncpa [#allocation5], 1

</llo_original>
